<compile_context>
chip_gen: v5e
topology: v5e:2x2
jax: 0.10.0
libtpu: 0.0.40
codegen_flags: <defaults>
</compile_context>

<pallas_src>
import functools

import jax
import jax.numpy as jnp
from jax.experimental import pallas as pl
from jax.experimental.pallas import tpu as pltpu


def _disp_kernel(x_ref, w_ref, m_ref, off_ref, o_ref, *, img_w):
    """Processes `nb` images per grid step, side by side along the lane axis.

    x_ref:   (nb, C, HW)    f32 input planes (NCHW flattened over H*W)
    w_ref:   (9*OC, C)      bf16 conv weights, BN scale folded, row = tap*OC + oc
    m_ref:   (9, nb*HW)     f32 per-tap boundary (pad) masks, grid-invariant
    off_ref: (OC, 1)        f32 folded conv-bias + BN offset
    o_ref:   (nb, OC, HW)   f32 output block
    """
    nb, C, HW = x_ref.shape
    OC = o_ref.shape[1]
    L = nb * HW

    # Hoisted: per-tap pad masks, broadcast once to (OC, L).  The center tap
    # (t == 4) never reads padding, so it needs no mask / no multiply.
    m = m_ref[...]
    masks = [None if t == 4 else jnp.broadcast_to(m[t:t + 1, :], (OC, L))
             for t in range(9)]

    # One lane-dense (C, L) bf16 plane holding the nb images side by side.
    imgs = [x_ref[n].astype(jnp.bfloat16) for n in range(nb)]
    x = imgs[0] if nb == 1 else jnp.concatenate(imgs, axis=1)

    # Single fused MXU contraction for all 9 taps and all nb images.
    p_all = jnp.dot(w_ref[...], x, preferred_element_type=jnp.float32)  # (9*OC, L)

    # Shift-the-output: rotate each tap's (OC, L) partial into place (XLU) and
    # zero the positions the 1-pixel pad would have zeroed (one VPU mul).
    acc = None
    for dy in range(3):
        for dx in range(3):
            t = dy * 3 + dx
            s = (dy - 1) * img_w + (dx - 1)          # flat offset this tap reads
            pt = p_all[t * OC:(t + 1) * OC, :]
            if s != 0:
                # out[p] must read input[p + s] == jnp.roll(input, -s)[p];
                # wrap-around positions are exactly the masked border.
                pt = pltpu.roll(pt, shift=(-s) % L, axis=1)
            if masks[t] is not None:
                pt = pt * masks[t]
            acc = pt if acc is None else acc + pt

    y = acc + off_ref[...]                            # folded bias + BN offset
    out = (0.3 * jax.nn.sigmoid(y)).astype(o_ref.dtype)
    for n in range(nb):
        o_ref[n] = out[:, n * HW:(n + 1) * HW]        # lane-aligned, lane-dense


def _pick_images_per_step(n_images):
    # Amortize the ~0.35us per-grid-step overhead but keep >= 2 grid steps so
    # the "parallel" batch axis can still be split across TensorCores (v7x).
    for nb in (8, 4, 2):
        if n_images % nb == 0 and n_images // nb >= 2:
            return nb
    return 1


@functools.partial(jax.jit, static_argnames=("images_per_step",))
def get_disp_pallas(x_nchw, w_oihw, conv_bias, gamma, beta, run_mean, run_var,
                    *, images_per_step=None):
    """Forward pass of get_disp.  x: (N, C, H, W) f32 -> (N, 2, H, W) f32."""
    eps = 1e-5
    N, C, H, W = x_nchw.shape
    OC = w_oihw.shape[0]
    HW = H * W
    # TODO(synk): general H, W would need H*W padded up to a multiple of 128 to
    # keep the output lane-dense; only H*W % 128 == 0 is supported here.
    assert HW % 128 == 0, "H*W must be a multiple of 128"

    nb = _pick_images_per_step(N) if images_per_step is None else images_per_step
    nb = max(1, min(nb, N))
    if N % nb:
        raise ValueError(f"images_per_step={nb} must divide batch size {N}")

    # Fold BatchNorm (inference mode, running stats) into the conv.
    # TODO(synk): training-mode batch statistics are not computed in-kernel.
    scale = gamma / jnp.sqrt(run_var + eps)                       # (OC,)
    offset = beta + (conv_bias - run_mean) * scale                # (OC,)
    w_scaled = w_oihw.astype(jnp.float32) * scale[:, None, None, None]
    # (OC, C, 3, 3) -> (3, 3, OC, C) -> (9*OC, C); row = (dy*3+dx)*OC + oc.
    w_stack = jnp.transpose(w_scaled, (2, 3, 0, 1)).reshape(9 * OC, C)
    w_stack = w_stack.astype(jnp.bfloat16)        # bf16 MXU operand, f32 acc
    off2 = offset.reshape(OC, 1).astype(jnp.float32)

    # Per-tap boundary masks (the F.pad zeros), periodic per image, built once
    # in the wrapper (tiny) so the kernel does no iota / modulo work.
    rr = jnp.arange(H)[:, None]
    cc = jnp.arange(W)[None, :]
    tap_masks = []
    for dy in range(3):
        for dx in range(3):
            m = jnp.ones((H, W), jnp.float32)
            if dy == 0:
                m = m * (rr != 0)
            if dy == 2:
                m = m * (rr != H - 1)
            if dx == 0:
                m = m * (cc != 0)
            if dx == 2:
                m = m * (cc != W - 1)
            tap_masks.append(m.reshape(HW))
    mask9 = jnp.tile(jnp.stack(tap_masks, axis=0), (1, nb))        # (9, nb*HW)

    # Free reshape (row-major): no pad, no transpose, no extra HBM pass.
    x_flat = x_nchw.astype(jnp.float32).reshape(N, C, HW)

    out_flat = pl.pallas_call(
        functools.partial(_disp_kernel, img_w=W),
        out_shape=jax.ShapeDtypeStruct((N, OC, HW), jnp.float32),
        grid_spec=pltpu.PrefetchScalarGridSpec(
            num_scalar_prefetch=0,
            grid=(N // nb,),
            in_specs=[
                pl.BlockSpec((nb, C, HW), lambda i: (i, 0, 0)),
                pl.BlockSpec((9 * OC, C), lambda i: (0, 0)),
                pl.BlockSpec((9, nb * HW), lambda i: (0, 0)),
                pl.BlockSpec((OC, 1), lambda i: (0, 0)),
            ],
            out_specs=pl.BlockSpec((nb, OC, HW), lambda i: (i, 0, 0)),
        ),
        compiler_params=pltpu.CompilerParams(
            dimension_semantics=("parallel",)),
    )(x_flat, w_stack, mask9, off2)

    # Free reshape back to NCHW layout.
    return out_flat.reshape(N, OC, H, W)


def _reference(x_nchw, w_oihw, conv_bias, gamma, beta, run_mean, run_var):
    eps = 1e-5
    xp = jnp.pad(x_nchw, ((0, 0), (0, 0), (1, 1), (1, 1)))
    conv = jax.lax.conv_general_dilated(
        xp, w_oihw, window_strides=(1, 1), padding="VALID",
        dimension_numbers=("NCHW", "OIHW", "NCHW"))
    conv = conv + conv_bias[None, :, None, None]
    y = (conv - run_mean[None, :, None, None]) / jnp.sqrt(
        run_var[None, :, None, None] + eps)
    y = y * gamma[None, :, None, None] + beta[None, :, None, None]
    return 0.3 * jax.nn.sigmoid(y)


if __name__ == "__main__":
    key = jax.random.PRNGKey(0)
    k_x, k_w, k_b, k_g, k_be, k_m, k_v = jax.random.split(key, 7)

    N, C, H, W = 2, 4, 16, 16
    OC = 2

    x = jax.random.normal(k_x, (N, C, H, W), jnp.float32)
    w = jax.random.normal(k_w, (OC, C, 3, 3), jnp.float32) * 0.1
    conv_bias = jax.random.normal(k_b, (OC,), jnp.float32) * 0.1
    gamma = 1.0 + 0.1 * jax.random.normal(k_g, (OC,), jnp.float32)
    beta = 0.1 * jax.random.normal(k_be, (OC,), jnp.float32)
    run_mean = 0.1 * jax.random.normal(k_m, (OC,), jnp.float32)
    run_var = jax.random.uniform(k_v, (OC,), jnp.float32, 0.5, 1.5)

    ref = _reference(x, w, conv_bias, gamma, beta, run_mean, run_var)

    # Default batching (keeps >= 2 parallel grid steps for this N).
    out = jax.block_until_ready(
        get_disp_pallas(x, w, conv_bias, gamma, beta, run_mean, run_var))
    assert out.shape == (N, OC, H, W)
    # bf16 MXU operands (f32 accumulation) => slightly relaxed tolerance.
    assert jnp.allclose(out, ref, atol=5e-3, rtol=5e-3), \
        "mismatch vs reference (default batching)"

    # Lane-batched path: both images in one grid step (L = 2*HW).
    out2 = jax.block_until_ready(
        get_disp_pallas(x, w, conv_bias, gamma, beta, run_mean, run_var,
                        images_per_step=2))
    assert jnp.allclose(out2, ref, atol=5e-3, rtol=5e-3), \
        "mismatch vs reference (lane-batched)"

    print("KERNEL_OK")
</pallas_src>

<mosaic_0001>
module attributes {stable_mosaic.version = 11 : i64} {
  func.func @_disp_kernel(%arg0: i32, %arg1: memref<1x4x256xf32, #tpu.memory_space<vmem>>, %arg2: memref<18x4xbf16, #tpu.memory_space<vmem>>, %arg3: memref<9x256xf32, #tpu.memory_space<vmem>>, %arg4: memref<2x1xf32, #tpu.memory_space<vmem>>, %arg5: memref<1x2x256xf32, #tpu.memory_space<vmem>>) attributes {dimension_semantics = [#tpu.dimension_semantics<parallel>], iteration_bounds = array<i64: 2>, scalar_prefetch = 0 : i64, scratch_operands = 0 : i64, tpu.core_type = #tpu.core_type<tc>, window_params = [{transform_indices = @transform_0, window_bounds = array<i64: 1, 4, 256>}, {pipeline_mode = #tpu.pipeline_mode<synchronous>, transform_indices = @transform_1, window_bounds = array<i64: 18, 4>}, {pipeline_mode = #tpu.pipeline_mode<synchronous>, transform_indices = @transform_2, window_bounds = array<i64: 9, 256>}, {pipeline_mode = #tpu.pipeline_mode<synchronous>, transform_indices = @transform_3, window_bounds = array<i64: 2, 1>}, {transform_indices = @transform_4, window_bounds = array<i64: 1, 2, 256>}]} {
    %c0 = arith.constant 0 : index
    %c0_0 = arith.constant 0 : index
    %0 = vector.load %arg3[%c0, %c0_0] : memref<9x256xf32, #tpu.memory_space<vmem>>, vector<9x256xf32>
    %1 = vector.extract_strided_slice %0 {offsets = [0, 0], sizes = [1, 256], strides = [1, 1]} : vector<9x256xf32> to vector<1x256xf32>
    %2 = vector.shape_cast %1 : vector<1x256xf32> to vector<1x256xf32>
    %3 = vector.broadcast %2 : vector<1x256xf32> to vector<2x256xf32>
    %4 = vector.extract_strided_slice %0 {offsets = [1, 0], sizes = [1, 256], strides = [1, 1]} : vector<9x256xf32> to vector<1x256xf32>
    %5 = vector.shape_cast %4 : vector<1x256xf32> to vector<1x256xf32>
    %6 = vector.broadcast %5 : vector<1x256xf32> to vector<2x256xf32>
    %7 = vector.extract_strided_slice %0 {offsets = [2, 0], sizes = [1, 256], strides = [1, 1]} : vector<9x256xf32> to vector<1x256xf32>
    %8 = vector.shape_cast %7 : vector<1x256xf32> to vector<1x256xf32>
    %9 = vector.broadcast %8 : vector<1x256xf32> to vector<2x256xf32>
    %10 = vector.extract_strided_slice %0 {offsets = [3, 0], sizes = [1, 256], strides = [1, 1]} : vector<9x256xf32> to vector<1x256xf32>
    %11 = vector.shape_cast %10 : vector<1x256xf32> to vector<1x256xf32>
    %12 = vector.broadcast %11 : vector<1x256xf32> to vector<2x256xf32>
    %13 = vector.extract_strided_slice %0 {offsets = [5, 0], sizes = [1, 256], strides = [1, 1]} : vector<9x256xf32> to vector<1x256xf32>
    %14 = vector.shape_cast %13 : vector<1x256xf32> to vector<1x256xf32>
    %15 = vector.broadcast %14 : vector<1x256xf32> to vector<2x256xf32>
    %16 = vector.extract_strided_slice %0 {offsets = [6, 0], sizes = [1, 256], strides = [1, 1]} : vector<9x256xf32> to vector<1x256xf32>
    %17 = vector.shape_cast %16 : vector<1x256xf32> to vector<1x256xf32>
    %18 = vector.broadcast %17 : vector<1x256xf32> to vector<2x256xf32>
    %19 = vector.extract_strided_slice %0 {offsets = [7, 0], sizes = [1, 256], strides = [1, 1]} : vector<9x256xf32> to vector<1x256xf32>
    %20 = vector.shape_cast %19 : vector<1x256xf32> to vector<1x256xf32>
    %21 = vector.broadcast %20 : vector<1x256xf32> to vector<2x256xf32>
    %22 = vector.extract_strided_slice %0 {offsets = [8, 0], sizes = [1, 256], strides = [1, 1]} : vector<9x256xf32> to vector<1x256xf32>
    %23 = vector.shape_cast %22 : vector<1x256xf32> to vector<1x256xf32>
    %24 = vector.broadcast %23 : vector<1x256xf32> to vector<2x256xf32>
    %c0_1 = arith.constant 0 : index
    %c0_2 = arith.constant 0 : index
    %c0_3 = arith.constant 0 : index
    %25 = vector.load %arg1[%c0_1, %c0_2, %c0_3] : memref<1x4x256xf32, #tpu.memory_space<vmem>>, vector<1x4x256xf32>
    %26 = vector.shape_cast %25 : vector<1x4x256xf32> to vector<4x256xf32>
    %27 = arith.truncf %26 : vector<4x256xf32> to vector<4x256xbf16>
    %c0_4 = arith.constant 0 : index
    %c0_5 = arith.constant 0 : index
    %28 = vector.load %arg2[%c0_4, %c0_5] : memref<18x4xbf16, #tpu.memory_space<vmem>>, vector<18x4xbf16>
    %cst = arith.constant dense<0.000000e+00> : vector<18x256xf32>
    %29 = tpu.matmul %28, %27, %cst {dimension_numbers = #tpu.dot_dimension_numbers<[1], [0], [0], [1], [0, 0, 1, 1], [], []>} : vector<18x4xbf16>, vector<4x256xbf16>, vector<18x256xf32> -> vector<18x256xf32>
    %30 = vector.extract_strided_slice %29 {offsets = [0, 0], sizes = [2, 256], strides = [1, 1]} : vector<18x256xf32> to vector<2x256xf32>
    %c17_i32 = arith.constant 17 : i32
    %31 = tpu.dynamic_rotate %30 by %c17_i32 dim 1 : vector<2x256xf32>, i32 -> vector<2x256xf32>
    %32 = arith.mulf %31, %3 : vector<2x256xf32>
    %33 = vector.extract_strided_slice %29 {offsets = [2, 0], sizes = [2, 256], strides = [1, 1]} : vector<18x256xf32> to vector<2x256xf32>
    %c16_i32 = arith.constant 16 : i32
    %34 = tpu.dynamic_rotate %33 by %c16_i32 dim 1 : vector<2x256xf32>, i32 -> vector<2x256xf32>
    %35 = arith.mulf %34, %6 : vector<2x256xf32>
    %36 = arith.addf %32, %35 : vector<2x256xf32>
    %37 = vector.extract_strided_slice %29 {offsets = [4, 0], sizes = [2, 256], strides = [1, 1]} : vector<18x256xf32> to vector<2x256xf32>
    %c15_i32 = arith.constant 15 : i32
    %38 = tpu.dynamic_rotate %37 by %c15_i32 dim 1 : vector<2x256xf32>, i32 -> vector<2x256xf32>
    %39 = arith.mulf %38, %9 : vector<2x256xf32>
    %40 = arith.addf %36, %39 : vector<2x256xf32>
    %41 = vector.extract_strided_slice %29 {offsets = [6, 0], sizes = [2, 256], strides = [1, 1]} : vector<18x256xf32> to vector<2x256xf32>
    %c1_i32 = arith.constant 1 : i32
    %42 = tpu.dynamic_rotate %41 by %c1_i32 dim 1 : vector<2x256xf32>, i32 -> vector<2x256xf32>
    %43 = arith.mulf %42, %12 : vector<2x256xf32>
    %44 = arith.addf %40, %43 : vector<2x256xf32>
    %45 = vector.extract_strided_slice %29 {offsets = [8, 0], sizes = [2, 256], strides = [1, 1]} : vector<18x256xf32> to vector<2x256xf32>
    %46 = arith.addf %44, %45 : vector<2x256xf32>
    %47 = vector.extract_strided_slice %29 {offsets = [10, 0], sizes = [2, 256], strides = [1, 1]} : vector<18x256xf32> to vector<2x256xf32>
    %c255_i32 = arith.constant 255 : i32
    %48 = tpu.dynamic_rotate %47 by %c255_i32 dim 1 : vector<2x256xf32>, i32 -> vector<2x256xf32>
    %49 = arith.mulf %48, %15 : vector<2x256xf32>
    %50 = arith.addf %46, %49 : vector<2x256xf32>
    %51 = vector.extract_strided_slice %29 {offsets = [12, 0], sizes = [2, 256], strides = [1, 1]} : vector<18x256xf32> to vector<2x256xf32>
    %c241_i32 = arith.constant 241 : i32
    %52 = tpu.dynamic_rotate %51 by %c241_i32 dim 1 : vector<2x256xf32>, i32 -> vector<2x256xf32>
    %53 = arith.mulf %52, %18 : vector<2x256xf32>
    %54 = arith.addf %50, %53 : vector<2x256xf32>
    %55 = vector.extract_strided_slice %29 {offsets = [14, 0], sizes = [2, 256], strides = [1, 1]} : vector<18x256xf32> to vector<2x256xf32>
    %c240_i32 = arith.constant 240 : i32
    %56 = tpu.dynamic_rotate %55 by %c240_i32 dim 1 : vector<2x256xf32>, i32 -> vector<2x256xf32>
    %57 = arith.mulf %56, %21 : vector<2x256xf32>
    %58 = arith.addf %54, %57 : vector<2x256xf32>
    %59 = vector.extract_strided_slice %29 {offsets = [16, 0], sizes = [2, 256], strides = [1, 1]} : vector<18x256xf32> to vector<2x256xf32>
    %c239_i32 = arith.constant 239 : i32
    %60 = tpu.dynamic_rotate %59 by %c239_i32 dim 1 : vector<2x256xf32>, i32 -> vector<2x256xf32>
    %61 = arith.mulf %60, %24 : vector<2x256xf32>
    %62 = arith.addf %58, %61 : vector<2x256xf32>
    %c0_6 = arith.constant 0 : index
    %c0_7 = arith.constant 0 : index
    %63 = vector.load %arg4[%c0_6, %c0_7] : memref<2x1xf32, #tpu.memory_space<vmem>>, vector<2x1xf32>
    %64 = vector.broadcast %63 : vector<2x1xf32> to vector<2x256xf32>
    %65 = arith.addf %62, %64 : vector<2x256xf32>
    %66 = arith.negf %65 : vector<2x256xf32>
    %67 = math.exp %66 : vector<2x256xf32>
    %cst_8 = arith.constant 1.000000e+00 : f32
    %68 = vector.broadcast %cst_8 : f32 to vector<2x256xf32>
    %69 = arith.addf %68, %67 : vector<2x256xf32>
    %70 = arith.divf %68, %69 : vector<2x256xf32>
    %cst_9 = arith.constant 3.000000e-01 : f32
    %71 = vector.broadcast %cst_9 : f32 to vector<2x256xf32>
    %72 = arith.mulf %71, %70 : vector<2x256xf32>
    %c0_10 = arith.constant 0 : index
    %c0_11 = arith.constant 0 : index
    %c0_12 = arith.constant 0 : index
    %73 = vector.load %arg5[%c0_10, %c0_11, %c0_12] : memref<1x2x256xf32, #tpu.memory_space<vmem>>, vector<1x2x256xf32>
    %74 = vector.shape_cast %73 : vector<1x2x256xf32> to vector<2x256xf32>
    %75 = vector.shape_cast %72 : vector<2x256xf32> to vector<1x2x256xf32>
    tpu.vector_store %arg5[%c0_10, %c0_11, %c0_12], %75 {strides = array<i32>} : memref<1x2x256xf32, #tpu.memory_space<vmem>>, vector<1x2x256xf32>,
    return
  }
  func.func @transform_0(%arg0: i32) -> (i32, i32, i32) {
    %c0_i32 = arith.constant 0 : i32
    %c0_i32_0 = arith.constant 0 : i32
    %c0_i32_1 = arith.constant 0 : i32
    return %arg0, %c0_i32, %c0_i32_0 : i32, i32, i32
  }
  func.func @transform_1(%arg0: i32) -> (i32, i32) {
    %c0_i32 = arith.constant 0 : i32
    %c0_i32_0 = arith.constant 0 : i32
    %c0_i32_1 = arith.constant 0 : i32
    return %c0_i32, %c0_i32_0 : i32, i32
  }
  func.func @transform_2(%arg0: i32) -> (i32, i32) {
    %c0_i32 = arith.constant 0 : i32
    %c0_i32_0 = arith.constant 0 : i32
    %c0_i32_1 = arith.constant 0 : i32
    return %c0_i32, %c0_i32_0 : i32, i32
  }
  func.func @transform_3(%arg0: i32) -> (i32, i32) {
    %c0_i32 = arith.constant 0 : i32
    %c0_i32_0 = arith.constant 0 : i32
    %c0_i32_1 = arith.constant 0 : i32
    return %c0_i32, %c0_i32_0 : i32, i32
  }
  func.func @transform_4(%arg0: i32) -> (i32, i32, i32) {
    %c0_i32 = arith.constant 0 : i32
    %c0_i32_0 = arith.constant 0 : i32
    %c0_i32_1 = arith.constant 0 : i32
    return %arg0, %c0_i32, %c0_i32_0 : i32, i32, i32
  }
}

</mosaic_0001>

<llo_original>
// kernel: get_disp_pallas.1
$region0: #{get_disp_pallas.1}
  #allocation0 [shape = 'u32[]', space=smem, size = 0x4, offset = 0x4, fixed_abs, tag = 'smem constant byte address 0x4 - core index']
  #allocation1 [shape = 'u32[72,128]{1,0:T(1,128)}', space=vmem, size = 0x9000, scoped, tag = 'internal scratch']
  %s0 = inlined_call_operand.vmem [shape: f32[2,4,256], index: 0, kind: input, shape index: {}]
  %s1 = inlined_call_operand.vmem [shape: bf16[18,4], index: 1, kind: input, shape index: {}]
  %s2 = inlined_call_operand.vmem [shape: f32[9,256], index: 2, kind: input, shape index: {}]
  %s3 = inlined_call_operand.vmem [shape: f32[2,1], index: 3, kind: input, shape index: {}]
  %s4 = inlined_call_operand.vmem [shape: f32[2,2,256], index: 4, kind: output, shape index: {}]
  %s5 = sld [smem:[#allocation0]]
  $region49: #{get_disp_pallas.1} parent=0
    _
  %s7 = ssub.s32 1, %s5
  %s8 = scalar_select 0, %s7, %s5
  loop: start=0, step=1, limit=4
  $region2: #{get_disp_pallas.1} parent=0 // loop_pre_header
    _
  $region3: #{get_disp_pallas.1} parent=0 // loop_header
    %s10 = sphi 0, %s14
    %p11 = scmp.ge.s32.totalorder %s10, 4
    %s20 = sphi 0, %s22
    %s23 = sphi 0, %s20
    %s24 = sphi 0, %s23
    %s40 = sphi 0, %s24
    %s44 = sphi 0, %s44
    %s46 = sphi 0, %s44
    %s47 = sphi 0, %s46
    %s61 = sphi 0, %s47
    %s65 = sphi 0, %s65
    %s67 = sphi 0, %s65
    %s68 = sphi 0, %s67
    %s82 = sphi 0, %s68
    %s86 = sphi 0, %s86
    %s88 = sphi 0, %s86
    %s89 = sphi 0, %s88
    %s103 = sphi 0, %s89
    %s109 = sphi 0, %s111
    %s112 = sphi 0, %s109
    %s113 = sphi 0, %s112
    %s129 = sphi 0, %s113
  $region4: #{get_disp_pallas.1} parent=0 // loop_header_branch
    %13 = sbr.rel (%p11) target = $region8
  $region5: #{get_disp_pallas.1} parent=0 // loop_body
    %s15 = ssub.s32 %s10, 1
    %s16 = ssub.s32 %s10, 2
    %s17 = sadd.s32 %s10, 1
    %s18 = ssub.s32 %s10, %s17
    %p19 = scmp.eq.s32.totalorder %s18, 0
    %s21 = sadd.s32 %s20, 1
    %s22 = scalar_select %p19, %s20, %s21
    %p25 = pneg %p19
    %p26 = scmp.eq.s32.totalorder %s10, 1
    %p27 = por %p25, %p26
    %p28 = scmp.ne.s32.totalorder %s20, %s23
    %p29 = scmp.eq.s32.totalorder %s10, 0
    %p30 = por %p28, %p29
    %p31 = scmp.ne.s32.totalorder %s20, %s23
    %p32 = scmp.eq.s32.totalorder %s15, 1
    %p33 = por %p31, %p32
    %p34 = scmp.ne.s32.totalorder %s23, %s24
    %p35 = scmp.eq.s32.totalorder %s15, 0
    %p36 = por %p34, %p35
    %p37 = scmp.ne.s32.totalorder %s23, %s24
    %p38 = scmp.eq.s32.totalorder %s16, 1
    %p39 = por %p37, %p38
    %p41 = scmp.ne.s32.totalorder %s24, %s40
    %p42 = scmp.eq.s32.totalorder %s16, 0
    %p43 = por %p41, %p42
    %s45 = sadd.s32 %s44, 1
    %p48 = scmp.eq.s32.totalorder %s10, 1
    %p49 = scmp.ne.s32.totalorder %s44, %s46
    %p50 = scmp.eq.s32.totalorder %s10, 0
    %p51 = por %p49, %p50
    %p52 = scmp.ne.s32.totalorder %s44, %s46
    %p53 = scmp.eq.s32.totalorder %s15, 1
    %p54 = por %p52, %p53
    %p55 = scmp.ne.s32.totalorder %s46, %s47
    %p56 = scmp.eq.s32.totalorder %s15, 0
    %p57 = por %p55, %p56
    %p58 = scmp.ne.s32.totalorder %s46, %s47
    %p59 = scmp.eq.s32.totalorder %s16, 1
    %p60 = por %p58, %p59
    %p62 = scmp.ne.s32.totalorder %s47, %s61
    %p63 = scmp.eq.s32.totalorder %s16, 0
    %p64 = por %p62, %p63
    %s66 = sadd.s32 %s65, 1
    %p69 = scmp.eq.s32.totalorder %s10, 1
    %p70 = scmp.ne.s32.totalorder %s65, %s67
    %p71 = scmp.eq.s32.totalorder %s10, 0
    %p72 = por %p70, %p71
    %p73 = scmp.ne.s32.totalorder %s65, %s67
    %p74 = scmp.eq.s32.totalorder %s15, 1
    %p75 = por %p73, %p74
    %p76 = scmp.ne.s32.totalorder %s67, %s68
    %p77 = scmp.eq.s32.totalorder %s15, 0
    %p78 = por %p76, %p77
    %p79 = scmp.ne.s32.totalorder %s67, %s68
    %p80 = scmp.eq.s32.totalorder %s16, 1
    %p81 = por %p79, %p80
    %p83 = scmp.ne.s32.totalorder %s68, %s82
    %p84 = scmp.eq.s32.totalorder %s16, 0
    %p85 = por %p83, %p84
    %s87 = sadd.s32 %s86, 1
    %p90 = scmp.eq.s32.totalorder %s10, 1
    %p91 = scmp.ne.s32.totalorder %s86, %s88
    %p92 = scmp.eq.s32.totalorder %s10, 0
    %p93 = por %p91, %p92
    %p94 = scmp.ne.s32.totalorder %s86, %s88
    %p95 = scmp.eq.s32.totalorder %s15, 1
    %p96 = por %p94, %p95
    %p97 = scmp.ne.s32.totalorder %s88, %s89
    %p98 = scmp.eq.s32.totalorder %s15, 0
    %p99 = por %p97, %p98
    %p100 = scmp.ne.s32.totalorder %s88, %s89
    %p101 = scmp.eq.s32.totalorder %s16, 1
    %p102 = por %p100, %p101
    %p104 = scmp.ne.s32.totalorder %s89, %s103
    %p105 = scmp.eq.s32.totalorder %s16, 0
    %p106 = por %p104, %p105
    %s107 = ssub.s32 %s10, %s17
    %p108 = scmp.eq.s32.totalorder %s107, 0
    %s110 = sadd.s32 %s109, 1
    %s111 = scalar_select %p108, %s109, %s110
    %p114 = pneg %p108
    %p115 = scmp.eq.s32.totalorder %s10, 1
    %p116 = por %p114, %p115
    %p117 = scmp.ne.s32.totalorder %s109, %s112
    %p118 = scmp.eq.s32.totalorder %s10, 0
    %p119 = por %p117, %p118
    %p120 = scmp.ne.s32.totalorder %s109, %s112
    %p121 = scmp.eq.s32.totalorder %s15, 1
    %p122 = por %p120, %p121
    %p123 = scmp.ne.s32.totalorder %s112, %s113
    %p124 = scmp.eq.s32.totalorder %s15, 0
    %p125 = por %p123, %p124
    %p126 = scmp.ne.s32.totalorder %s112, %s113
    %p127 = scmp.eq.s32.totalorder %s16, 1
    %p128 = por %p126, %p127
    %p130 = scmp.ne.s32.totalorder %s113, %s129
    %p131 = scmp.eq.s32.totalorder %s16, 0
    %p132 = por %p130, %p131
    %p133 = scmp.le.s32.totalorder 1, %s10
    %p134 = scmp.lt.s32.totalorder %s10, 3
    %p135 = pnand %p133, %p134
    %p136 = pneg %p135
    // Predicated region
    $region9: #{get_disp_pallas.1} parent=5 // pred_check
      _
    $region10: #{get_disp_pallas.1} parent=5 // pred_check_branch
      %138 = sbr.rel (%p135) target = $region12
    $region11: #{get_disp_pallas.1} parent=5 // pred_region
      %s139 = ssub.s32 %s10, 1
      // Predicated region
      $region13: #{get_disp_pallas.1} parent=11 // pred_check
        %p140 = pneg %p57
      $region14: #{get_disp_pallas.1} parent=11 // pred_check_branch
        %142 = sbr.rel (%p140) target = $region16
      $region15: #{get_disp_pallas.1} parent=11 // pred_region
        _
      $region16: #{get_disp_pallas.1} parent=11 // pred_fallthru
        _
      // Predicated region
      $region17: #{get_disp_pallas.1} parent=11 // pred_check
        %p143 = pneg %p78
      $region18: #{get_disp_pallas.1} parent=11 // pred_check_branch
        %145 = sbr.rel (%p143) target = $region20
      $region19: #{get_disp_pallas.1} parent=11 // pred_region
        _
      $region20: #{get_disp_pallas.1} parent=11 // pred_fallthru
        _
      // Predicated region
      $region21: #{get_disp_pallas.1} parent=11 // pred_check
        %p146 = pneg %p99
      $region22: #{get_disp_pallas.1} parent=11 // pred_check_branch
        %148 = sbr.rel (%p146) target = $region24
      $region23: #{get_disp_pallas.1} parent=11 // pred_region
        _
      $region24: #{get_disp_pallas.1} parent=11 // pred_fallthru
        _
    $region12: #{get_disp_pallas.1} parent=5 // pred_fallthru
      _
    %p149 = scmp.lt.s32.totalorder %s10, 2
    // Predicated region
    $region25: #{get_disp_pallas.1} parent=5 // pred_check
      %p150 = pneg %p149
    $region26: #{get_disp_pallas.1} parent=5 // pred_check_branch
      %152 = sbr.rel (%p150) target = $region28
    $region27: #{get_disp_pallas.1} parent=5 // pred_region
      // Predicated region
      $region29: #{get_disp_pallas.1} parent=27 // pred_check
        %p153 = pneg %p30
      $region30: #{get_disp_pallas.1} parent=27 // pred_check_branch
        %155 = sbr.rel (%p153) target = $region32
      $region31: #{get_disp_pallas.1} parent=27 // pred_region
        %p156 = scmp.lt.s32.totalorder %s10, 1
        %s157 = scalar_select %p156, %s10, 1
        %s158 = smul.addr %s157, 2
        %s159 = smul.addr %s158, 4
        %s160 = scalar_lea.vmem %s0, %s159
      $region32: #{get_disp_pallas.1} parent=27 // pred_fallthru
        _
    $region28: #{get_disp_pallas.1} parent=5 // pred_fallthru
      _
    %p161 = scmp.le.s32.totalorder 1, %s10
    %p162 = scmp.lt.s32.totalorder %s10, 3
    %p163 = pnand %p161, %p162
    %p164 = pneg %p163
    // Predicated region
    $region33: #{get_disp_pallas.1} parent=5 // pred_check
      _
    $region34: #{get_disp_pallas.1} parent=5 // pred_check_branch
      %166 = sbr.rel (%p163) target = $region36
    $region35: #{get_disp_pallas.1} parent=5 // pred_region
      %s167 = ssub.s32 %s10, 1
      %p168 = scmp.lt.s32.totalorder %s15, 1
      %s169 = scalar_select %p168, %s15, 1
      %s170 = smul.addr %s169, 2
      %s171 = smul.addr %s170, 4
      %s172 = scalar_lea.vmem %s0, %s171
      %p173 = pneg %p36
      %p174 = pneg %p33
      %p175 = pneg %p57
      %p176 = pneg %p54
      %p177 = pneg %p78
      %p178 = pneg %p75
      %p179 = pneg %p99
      %p180 = pneg %p96
      %p181 = pneg %p125
      %p182 = pneg %p122
      %p183 = scmp.lt.s32.totalorder %s15, 1
      %s184 = scalar_select %p183, %s15, 1
      %s185 = smul.addr %s184, 2
      %s186 = smul.addr %s185, 2
      %s187 = scalar_lea.vmem %s4, %s186
      %p188 = scmp.lt.s32.totalorder %s15, 1
      %s189 = scalar_select %p188, %s15, 1
      %s190 = smul.addr %s189, 2
      %s191 = smul.addr %s190, 4
      %s192 = scalar_lea.vmem %s0, %s191
      %p193 = scmp.lt.s32.totalorder %s15, 1
      %s194 = scalar_select %p193, %s15, 1
      %s195 = smul.addr %s194, 2
      %s196 = smul.addr %s195, 2
      %s197 = scalar_lea.vmem %s4, %s196
      %v199 = vld [vmem:[%s2] sm:$0xff]
      %v200 = vld [vmem:[%s2 + $0x8] sm:$0xff]
      %v201 = vld [vmem:[%s2 + $0x10] sm:$0x1]
      %v202 = vld [vmem:[%s2 + $0x18] sm:$0x1]
      %v203 = vperm.slane %v199, 0
      %v204 = vperm.slane %v200, 0
      %v205 = vperm.slane %v199, 1
      %v206 = vperm.slane %v200, 1
      %v207 = vperm.slane %v199, 2
      %v208 = vperm.slane %v200, 2
      %v209 = vperm.slane %v199, 3
      %v210 = vperm.slane %v200, 3
      %v211 = vperm.slane %v199, 5
      %v212 = vperm.slane %v200, 5
      %v213 = vperm.slane %v199, 6
      %v214 = vperm.slane %v200, 6
      %v215 = vperm.slane %v199, 7
      %v216 = vperm.slane %v200, 7
      %v217 = vperm.slane %v201, 0
      %v218 = vperm.slane %v202, 0
      %v219 = vld [vmem:[%s192] sm:$0xff]
      %221 = vst [vmem:[#allocation1] ss:$2 sm:$0xff] %v219
      %v222 = vld.sshfl [vmem:[#allocation1] sm:$0xff pattern:$0x75316420]
      %v223 = vld.sshfl [vmem:[#allocation1 + $0x8] sm:$0xff pattern:$0x75316420]
      %v226 = vpack.c.bf16 %v222, %v222
      %v227 = vpack.c.bf16 %v223, %v223
      %v228 = vld [vmem:[%s1] sm:$0xf]
      %v229 = vld [vmem:[%s1 + $0x4] sm:$0xf]
      %v230 = vld [vmem:[%s1 + $0x8] sm:$0x1]
      %v234 = vunpack.c.l.b16 %v228
      %v235 = vunpack.c.l.b16 %v229
      %v236 = vunpack.c.l.b16 %v230
      %v237 = vpack.c.b16 %v235, %v234
      %v238 = vpack.c.b16 %v236, %v236
      %vm239 = vcmask 31744
      %v241 = vsel %vm239, %v237, 0
      %v244 = vsel %vm239, %v238, 0
      %vm246 = vcmask 1041408
      %v248 = vsel %vm246, %v226, 0
      %v251 = vsel %vm246, %v227, 0
      %253 = vmatpush.bf16.msra.mxu0 0
      %254 = vmatpush.bf16.msra.mxu0 0
      %255 = vmatpush.bf16.msra.mxu0 0
      %256 = vmatpush.bf16.msra.mxu0 0
      %257 = vmatpush.bf16.msra.mxu0 0
      %258 = vmatpush.bf16.msra.mxu0 0
      %259 = vmatpush.bf16.msra.mxu0 0
      %260 = vmatpush.bf16.msra.mxu0 %v248
      %261 = vmatmul.bf16.gmra.mxu0 %v241
      %v262 = vpop.f32.mrf.mxu0
      %v263 = vadd.f32 0.0, %v262
      %v264 = vpop.f32.mrf.mxu0
      %v265 = vadd.f32 0.0, %v264
      %266 = vmatmul.bf16.gmra.mxu0 %v244
      %v267 = vpop.f32.mrf.mxu0
      %v268 = vadd.f32 0.0, %v267
      %v269 = vpop.f32.mrf.mxu0
      %270 = vdwg.mxu0
      %271 = vmatpush.bf16.msra.mxu0 0
      %272 = vmatpush.bf16.msra.mxu0 0
      %273 = vmatpush.bf16.msra.mxu0 0
      %274 = vmatpush.bf16.msra.mxu0 0
      %275 = vmatpush.bf16.msra.mxu0 0
      %276 = vmatpush.bf16.msra.mxu0 0
      %277 = vmatpush.bf16.msra.mxu0 0
      %278 = vmatpush.bf16.msra.mxu0 %v251
      %279 = vmatmul.bf16.gmra.mxu0 %v241
      %v280 = vpop.f32.mrf.mxu0
      %v281 = vadd.f32 0.0, %v280
      %v282 = vpop.f32.mrf.mxu0
      %v283 = vadd.f32 0.0, %v282
      %284 = vmatmul.bf16.gmra.mxu0 %v244
      %v285 = vpop.f32.mrf.mxu0
      %v286 = vadd.f32 0.0, %v285
      %v287 = vpop.f32.mrf.mxu0
      %288 = vdwg.mxu0
      %289 = vrot.lane.b32.xlu0 %v263, 17
      %v290 = vpop.permute.xlu0 %289
      %291 = vrot.lane.b32.xlu0 %v281, 17
      %v292 = vpop.permute.xlu0 %291
      %v293 = vlaneseq
      %v294 = vand.u32 %v293, 127
      %vm295 = vcmp.lt.s32.totalorder %v294, 17
      %v296 = vsel %vm295, %v290, %v292
      %v297 = vsel %vm295, %v292, %v290
      %v298 = vmul.f32 %v297, %v203
      %v299 = vmul.f32 %v296, %v204
      %v302 = vrot.slane %v263, 2
      %v303 = vrot.slane %v281, 2
      %306 = vrot.lane.b32.xlu0 %v302, 16
      %v307 = vpop.permute.xlu0 %306
      %308 = vrot.lane.b32.xlu0 %v303, 16
      %v309 = vpop.permute.xlu0 %308
      %vm310 = vcmp.lt.s32.totalorder %v294, 16
      %v311 = vsel %vm310, %v307, %v309
      %v312 = vsel %vm310, %v309, %v307
      %v313 = vmul.f32 %v312, %v205
      %v314 = vmul.f32 %v311, %v206
      %v315 = vadd.f32 %v298, %v313
      %v316 = vadd.f32 %v299, %v314
      %v317 = vrot.slane %v263, 4
      %v318 = vrot.slane %v281, 4
      %321 = vrot.lane.b32.xlu0 %v317, 15
      %v322 = vpop.permute.xlu0 %321
      %323 = vrot.lane.b32.xlu0 %v318, 15
      %v324 = vpop.permute.xlu0 %323
      %vm325 = vcmp.lt.s32.totalorder %v294, 15
      %v326 = vsel %vm325, %v322, %v324
      %v327 = vsel %vm325, %v324, %v322
      %v328 = vmul.f32 %v327, %v207
      %v329 = vmul.f32 %v326, %v208
      %v330 = vadd.f32 %v315, %v328
      %v331 = vadd.f32 %v316, %v329
      %v332 = vrot.slane %v263, 6
      %v333 = vrot.slane %v281, 6
      %336 = vrot.lane.b32.xlu0 %v332, 1
      %v337 = vpop.permute.xlu0 %336
      %338 = vrot.lane.b32.xlu0 %v333, 1
      %v339 = vpop.permute.xlu0 %338
      %vm340 = vcmp.lt.s32.totalorder %v294, 1
      %v341 = vsel %vm340, %v337, %v339
      %v342 = vsel %vm340, %v339, %v337
      %v343 = vmul.f32 %v342, %v209
      %v344 = vmul.f32 %v341, %v210
      %v345 = vadd.f32 %v330, %v343
      %v346 = vadd.f32 %v331, %v344
      %v347 = vadd.f32 %v345, %v265
      %v348 = vadd.f32 %v346, %v283
      %v351 = vrot.slane %v265, 2
      %v352 = vrot.slane %v283, 2
      %355 = vrot.lane.b32.xlu0 %v351, 127
      %v356 = vpop.permute.xlu0 %355
      %357 = vrot.lane.b32.xlu0 %v352, 127
      %v358 = vpop.permute.xlu0 %357
      %vm359 = vcmp.lt.s32.totalorder %v294, 127
      %v360 = vsel %vm359, %v356, %v358
      %v361 = vsel %vm359, %v358, %v356
      %v362 = vmul.f32 %v360, %v211
      %v363 = vmul.f32 %v361, %v212
      %v364 = vadd.f32 %v347, %v362
      %v365 = vadd.f32 %v348, %v363
      %v366 = vrot.slane %v265, 4
      %v367 = vrot.slane %v283, 4
      %370 = vrot.lane.b32.xlu0 %v366, 113
      %v371 = vpop.permute.xlu0 %370
      %372 = vrot.lane.b32.xlu0 %v367, 113
      %v373 = vpop.permute.xlu0 %372
      %vm374 = vcmp.lt.s32.totalorder %v294, 113
      %v375 = vsel %vm374, %v371, %v373
      %v376 = vsel %vm374, %v373, %v371
      %v377 = vmul.f32 %v375, %v213
      %v378 = vmul.f32 %v376, %v214
      %v379 = vadd.f32 %v364, %v377
      %v380 = vadd.f32 %v365, %v378
      %v381 = vrot.slane %v265, 6
      %v382 = vrot.slane %v283, 6
      %385 = vrot.lane.b32.xlu0 %v381, 112
      %v386 = vpop.permute.xlu0 %385
      %387 = vrot.lane.b32.xlu0 %v382, 112
      %v388 = vpop.permute.xlu0 %387
      %vm389 = vcmp.lt.s32.totalorder %v294, 112
      %v390 = vsel %vm389, %v386, %v388
      %v391 = vsel %vm389, %v388, %v386
      %v392 = vmul.f32 %v390, %v215
      %v393 = vmul.f32 %v391, %v216
      %v394 = vadd.f32 %v379, %v392
      %v395 = vadd.f32 %v380, %v393
      %396 = vrot.lane.b32.xlu0 %v268, 111
      %v397 = vpop.permute.xlu0 %396
      %398 = vrot.lane.b32.xlu0 %v286, 111
      %v399 = vpop.permute.xlu0 %398
      %vm400 = vcmp.lt.s32.totalorder %v294, 111
      %v401 = vsel %vm400, %v397, %v399
      %v402 = vsel %vm400, %v399, %v397
      %v403 = vmul.f32 %v401, %v217
      %v404 = vmul.f32 %v402, %v218
      %v405 = vadd.f32 %v394, %v403
      %v406 = vadd.f32 %v395, %v404
      %v407 = vld [vmem:[%s3] sm:$0x3]
      %409 = vset.pattern.permute.xlu0 0
      %410 = vperm.xlu0 %409, %v407
      %v411 = vpop.permute.xlu0 %410
      %v413 = vadd.f32 %v405, %v411
      %v414 = vadd.f32 %v406, %v411
      %v415 = vxor.u32 %v413, 2147483648
      %v416 = vxor.u32 %v414, 2147483648
      %v417 = vmul.f32 %v415, 1.442695
      %v418 = vpow.pop %v417
      %v419 = vmul.f32 %v416, 1.442695
      %v420 = vpow.pop %v419
      %v421 = vadd.f32 %v418, 1.0
      %v422 = vadd.f32 %v420, 1.0
      %v423 = vrcp.pop %v421
      %v424 = vmul.f32 %v421, %v423
      %v425 = vsub.f32 1.0, %v424
      %v426 = vmul.f32 %v423, %v425
      %v427 = vadd.f32 %v423, %v426
      %vm428 = vweird.f32 %v421
      %vm429 = vweird.f32 %v423
      %vm430 = vmor %vm428, %vm429
      %v431 = vsel %vm430, %v423, %v427
      %v432 = vand.u32 2147483647, %v421
      %vm433 = vcmp.eq.f32.partialorder %v432, 8.507059e+37
      %v434 = vand.u32 %v421, 2147483648
      %v435 = vor.u32 1.1754944e-38, %v434
      %v436 = vsel %vm433, %v435, %v431
      %v437 = vmul.f32 1.0, %v436
      %v438 = vrcp.pop %v422
      %v439 = vmul.f32 %v422, %v438
      %v440 = vsub.f32 1.0, %v439
      %v441 = vmul.f32 %v438, %v440
      %v442 = vadd.f32 %v438, %v441
      %vm443 = vweird.f32 %v422
      %vm444 = vweird.f32 %v438
      %vm445 = vmor %vm443, %vm444
      %v446 = vsel %vm445, %v438, %v442
      %v447 = vand.u32 2147483647, %v422
      %vm448 = vcmp.eq.f32.partialorder %v447, 8.507059e+37
      %v449 = vand.u32 %v422, 2147483648
      %v450 = vor.u32 1.1754944e-38, %v449
      %v451 = vsel %vm448, %v450, %v446
      %v452 = vmul.f32 1.0, %v451
      %v453 = vmul.f32 %v437, 0.3
      %v454 = vmul.f32 %v452, 0.3
      %v457 = vrot.slane %v454, 6
      %v458 = vsel %vm246, %v453, %v457
      %460 = vst [vmem:[%s197] sm:$0xf] %v458
      %p461 = scmp.lt.s32.totalorder %s15, 1
      %s462 = scalar_select %p461, %s15, 1
      %s463 = smul.addr %s462, 2
      %s464 = smul.addr %s463, 2
      %s465 = scalar_lea.vmem %s4, %s464
      // Predicated region
      $region37: #{get_disp_pallas.1} parent=35 // pred_check
        %p466 = pneg %p122
      $region38: #{get_disp_pallas.1} parent=35 // pred_check_branch
        %468 = sbr.rel (%p466) target = $region40
      $region39: #{get_disp_pallas.1} parent=35 // pred_region
        _
      $region40: #{get_disp_pallas.1} parent=35 // pred_fallthru
        _
    $region36: #{get_disp_pallas.1} parent=5 // pred_fallthru
      _
    %p469 = scmp.le.s32.totalorder 2, %s10
    // Predicated region
    $region41: #{get_disp_pallas.1} parent=5 // pred_check
      %p470 = pneg %p469
    $region42: #{get_disp_pallas.1} parent=5 // pred_check_branch
      %472 = sbr.rel (%p470) target = $region44
    $region43: #{get_disp_pallas.1} parent=5 // pred_region
      %s473 = ssub.s32 %s10, 2
      // Predicated region
      $region45: #{get_disp_pallas.1} parent=43 // pred_check
        %p474 = pneg %p128
      $region46: #{get_disp_pallas.1} parent=43 // pred_check_branch
        %476 = sbr.rel (%p474) target = $region48
      $region47: #{get_disp_pallas.1} parent=43 // pred_region
        %p477 = scmp.lt.s32.totalorder %s16, 1
        %s478 = scalar_select %p477, %s16, 1
        %s479 = smul.addr %s478, 2
        %s480 = smul.addr %s479, 2
        %s481 = scalar_lea.vmem %s4, %s480
      $region48: #{get_disp_pallas.1} parent=43 // pred_fallthru
        _
    $region44: #{get_disp_pallas.1} parent=5 // pred_fallthru
      _
  $region6: #{get_disp_pallas.1} parent=0 // loop_footer
    %s14 = sadd.s32 1, %s10
  $region7: #{get_disp_pallas.1} parent=0 // loop_footer_branch
    %9 = sbr.rel target = $region3
  $region8: #{get_disp_pallas.1} parent=0 // loop_exit
    _

</llo_original>
